<compile_context>
chip_gen: v7x
topology: tpu7x:2x2x1
jax: 0.10.0
libtpu: 0.0.40
codegen_flags: <defaults>
</compile_context>

<pallas_src>
import jax
import jax.numpy as jnp
from jax.experimental import pallas as pl
from jax.experimental.pallas import tpu as pltpu


def _copy_kernel(x_ref, o_ref):
    # Identity copy of one (TM, LANE) tile resident in VMEM.
    o_ref[...] = x_ref[...]


def _choose_tiling(total, itemsize, tile_bytes_cap=4 * 1024 * 1024):
    """Pick a lane-dense (rows, lane) factorization and a row-tile TM.

    Returns (rows, lane, tm) or None if no 128-aligned factorization exists.
    """
    # First pass: prefer a lane width whose row count is a multiple of 8 so we
    # can tile (and pipeline) along the row dimension.
    for lane in (2048, 1024, 512, 256, 128):
        if total % lane:
            continue
        rows = total // lane
        if rows % 8 == 0:
            max_tm = max(8, tile_bytes_cap // (lane * itemsize))
            tm = 8
            # Largest multiple of 8 that divides rows and fits the tile cap.
            m = 8
            limit = min(rows, max_tm)
            while m <= limit:
                if rows % m == 0:
                    tm = m
                m += 8
            return rows, lane, tm
    # Second pass: accept a single full-extent block if it is small enough
    # (block dims equal to full array dims always satisfy the (8,128) rule).
    for lane in (2048, 1024, 512, 256, 128):
        if total % lane:
            continue
        rows = total // lane
        if rows * lane * itemsize <= tile_bytes_cap:
            return rows, lane, rows
    return None


def _pallas_copy_flat(flat):
    """Element-order-preserving copy of a flat array via a tiled Pallas kernel.

    Returns None if no lane-aligned tiling exists (caller falls back to the
    metadata-only jnp.reshape path).
    """
    total = flat.shape[0]
    tiling = _choose_tiling(total, flat.dtype.itemsize)
    if tiling is None:
        return None
    rows, lane, tm = tiling
    x2d = jnp.reshape(flat, (rows, lane))

    y2d = pl.pallas_call(
        _copy_kernel,
        out_shape=jax.ShapeDtypeStruct((rows, lane), flat.dtype),
        grid=(rows // tm,),
        in_specs=[pl.BlockSpec((tm, lane), lambda i: (i, 0))],
        out_specs=pl.BlockSpec((tm, lane), lambda i: (i, 0)),
        # Donate the input buffer: same shape/dtype, input is dead afterwards.
        input_output_aliases={0: 0},
        compiler_params=pltpu.CompilerParams(
            # Independent tiles -> shard across TensorCores on v7x megacore.
            dimension_semantics=("parallel",),
        ),
    )(x2d)
    return jnp.reshape(y2d, (total,))


class Reshape:
    """JAX/Pallas equivalent of the PyTorch Reshape module."""

    def __init__(self, shape):
        self.shape = tuple(shape)

    def __call__(self, x):
        # Resolve the target shape exactly like the PyTorch module.
        if self.shape[0] == -1:
            target_shape = (x.shape[0],) + tuple(self.shape[1:])
        else:
            target_shape = self.shape

        total = 1
        for d in x.shape:
            total *= d

        flat = jnp.reshape(x, (total,))
        y_flat = _pallas_copy_flat(flat)
        if y_flat is None:
            # No 128-aligned factorization: reshape is metadata-only anyway,
            # so skip the copy entirely (the optimal path per the perf review).
            return jnp.reshape(x, target_shape)
        return jnp.reshape(y_flat, target_shape)


if __name__ == "__main__":
    key = jax.random.PRNGKey(0)
    # Small NCHW input consistent with a ViT-on-MNIST patchification usage:
    # (batch=2, channels=4, H=16, W=16) -> reshape to (-1, 64, 16)
    x = jax.random.normal(key, (2, 4, 16, 16), dtype=jnp.float32)

    module = Reshape((-1, 64, 16))
    y = module(x)
    y = jax.block_until_ready(y)

    # Sanity check against plain jnp.reshape (same row-major semantics as torch).
    expected = jnp.reshape(x, (x.shape[0], 64, 16))
    assert y.shape == (2, 64, 16), y.shape
    assert y.dtype == x.dtype
    assert bool(jnp.all(y == expected))

    print("KERNEL_OK")
</pallas_src>

<mosaic_0001>
module attributes {stable_mosaic.version = 11 : i64} {
  func.func @_copy_kernel(%arg0: i32, %arg1: memref<8x256xf32, #tpu.memory_space<vmem>>, %arg2: memref<8x256xf32, #tpu.memory_space<vmem>>) attributes {dimension_semantics = [#tpu.dimension_semantics<parallel>], iteration_bounds = array<i64: 1>, scalar_prefetch = 0 : i64, scratch_operands = 0 : i64, tpu.core_type = #tpu.core_type<tc>, window_params = [{transform_indices = @transform_0, window_bounds = array<i64: 8, 256>}, {transform_indices = @transform_1, window_bounds = array<i64: 8, 256>}]} {
    %c0 = arith.constant 0 : index
    %c0_0 = arith.constant 0 : index
    %0 = vector.load %arg1[%c0, %c0_0] : memref<8x256xf32, #tpu.memory_space<vmem>>, vector<8x256xf32>
    %c0_1 = arith.constant 0 : index
    %c0_2 = arith.constant 0 : index
    %1 = vector.load %arg2[%c0_1, %c0_2] : memref<8x256xf32, #tpu.memory_space<vmem>>, vector<8x256xf32>
    tpu.vector_store %arg2[%c0_1, %c0_2], %0 {strides = array<i32>} : memref<8x256xf32, #tpu.memory_space<vmem>>, vector<8x256xf32>,
    return
  }
  func.func @transform_0(%arg0: i32) -> (i32, i32) {
    %c0_i32 = arith.constant 0 : i32
    %c0_i32_0 = arith.constant 0 : i32
    return %arg0, %c0_i32 : i32, i32
  }
  func.func @transform_1(%arg0: i32) -> (i32, i32) {
    %c0_i32 = arith.constant 0 : i32
    %c0_i32_0 = arith.constant 0 : i32
    return %arg0, %c0_i32 : i32, i32
  }
}

</mosaic_0001>

<llo_original>
// kernel: tpu_custom_call.1
$region0: #{tpu_custom_call.1}
  #allocation0 [shape = 'u32[]', space=smem, size = 0x4, offset = 0x4, fixed_abs, tag = 'smem constant byte address 0x4 - core index']
  #allocation1 [shape = 'u32[144,128]{1,0:T(1,128)}', space=vmem, size = 0x12000, scoped, tag = 'internal scratch']
  %s0 = inlined_call_operand.hbm [shape: f32[8,256], index: 0, kind: input, shape index: {}, may-alias: {0,1}]
  %s1 = inlined_call_operand.hbm [shape: f32[8,256], index: 1, kind: output, shape index: {}, may-alias: {0,1}]
  %s2 = sld [smem:[#allocation0]]
  $region18: #{tpu_custom_call.1} parent=0
    _
  %s4 = ssub.s32 1, %s2
  %s5 = scalar_select 0, %s4, %s2
  $region1: #{tpu_custom_call.1} parent=0
    #allocation2 [shape = 'u8[8192]{0}', space=vmem, size = 0x2000, scoped, tag = 'input window, operand 0, single buffered']
    #allocation3 [shape = 's32[1]{0}', space=sflag, size = 0x4, scoped, tag = 'scoped memory for tpu_custom_call.1']
    #allocation4 [shape = 's32[1]{0}', space=sflag, size = 0x4, scoped, tag = 'scoped memory for tpu_custom_call.1']
    #allocation5 [shape = 'u8[8192]{0}', space=vmem, size = 0x2000, scoped, tag = 'output window, operand 0, single buffered']
    %6 = vsyncpa [#allocation3], 0
    %7 = vsyncpa [#allocation4], 0
    // Predicated region
    $region2: #{tpu_custom_call.1} parent=1 // pred_check
      _
    $region3: #{tpu_custom_call.1} parent=1 // pred_check_branch
      %9 = sbr.rel (0) target = $region5
    $region4: #{tpu_custom_call.1} parent=1 // pred_region
      %s11 = ssub.s32 256, 256
      %12 = vsyncadd [#allocation3], %s11
      %s14 = sshll.u32 [#allocation2], 4
      %s15 = int_to_ptr.vmem [resolvable:$true] %s14
      %17 = dma.hbm_to_vmem [thread:$0]  %s0, 256, %s15, [#allocation3]
    $region5: #{tpu_custom_call.1} parent=1 // pred_fallthru
      _
    // Predicated region
    $region6: #{tpu_custom_call.1} parent=1 // pred_check
      _
    $region7: #{tpu_custom_call.1} parent=1 // pred_check_branch
      %19 = sbr.rel (0) target = $region9
    $region8: #{tpu_custom_call.1} parent=1 // pred_region
      %20 = dma.done [#allocation3], 256
    $region9: #{tpu_custom_call.1} parent=1 // pred_fallthru
      _
    %v21 = vld [vmem:[#allocation2] sm:$0xff]
    %v22 = vld [vmem:[#allocation2 + $0x8] sm:$0xff]
    %23 = vst [vmem:[#allocation5] sm:$0xff] %v21
    %24 = vst [vmem:[#allocation5 + $0x8] sm:$0xff] %v22
    // Predicated region
    $region10: #{tpu_custom_call.1} parent=1 // pred_check
      _
    $region11: #{tpu_custom_call.1} parent=1 // pred_check_branch
      %26 = sbr.rel (0) target = $region13
    $region12: #{tpu_custom_call.1} parent=1 // pred_region
      %s28 = ssub.s32 256, 256
      %29 = vsyncadd [#allocation4], %s28
      %s31 = sshll.u32 [#allocation5], 4
      %s32 = int_to_ptr.vmem [resolvable:$true] %s31
      %34 = dma.vmem_to_hbm [thread:$0]  %s32, 256, %s1, [#allocation4]
    $region13: #{tpu_custom_call.1} parent=1 // pred_fallthru
      _
    // Predicated region
    $region14: #{tpu_custom_call.1} parent=1 // pred_check
      _
    $region15: #{tpu_custom_call.1} parent=1 // pred_check_branch
      %36 = sbr.rel (0) target = $region17
    $region16: #{tpu_custom_call.1} parent=1 // pred_region
      %37 = dma.done [#allocation4], 256
    $region17: #{tpu_custom_call.1} parent=1 // pred_fallthru
      _
    %38 = vsyncpa [#allocation3], 1
    %39 = vsyncpa [#allocation4], 1

</llo_original>
